<compile_context>
chip_gen: v7x
topology: tpu7x:2x2x1
jax: 0.10.0
libtpu: 0.0.40
codegen_flags: <defaults>
</compile_context>

<pallas_src>
import jax
import jax.numpy as jnp
from jax.experimental import pallas as pl
from jax.experimental.pallas import tpu as pltpu


def _kv_memory_kernel(ids_ref, q_ref, kemb_ref, vemb_ref, o_ref):
    # ids_ref : (2N+1, TB, 1) int32 — rows [0:N] keys (position-major),
    #           rows [N:2N] values, row [2N] pair_length.
    # q_ref   : (TB, Dk) float32
    # kemb_ref: (Vk, Dk) mxu_dtype (VMEM-resident across grid steps)
    # vemb_ref: (Vv, Dv) mxu_dtype (VMEM-resident across grid steps)
    # o_ref   : (TB, Dv) float32
    n2p1, TB, _ = ids_ref.shape
    N = (n2p1 - 1) // 2
    Vk, Dk = kemb_ref.shape
    Vv, Dv = vemb_ref.shape
    F = N * TB
    mxu_dtype = kemb_ref.dtype

    # --- fused integer block: keys / values in flat position-major order -------------
    # flat row r = n * TB + b  (b = local batch row).  Concats are sublane-aligned.
    keys_flat = jnp.concatenate([ids_ref[n] for n in range(N)], axis=0)       # (F, 1)
    vals_flat = jnp.concatenate([ids_ref[N + n] for n in range(N)], axis=0)   # (F, 1)
    plen = ids_ref[2 * N]                                                     # (TB, 1)
    q = q_ref[...]                                                            # (TB, Dk) f32

    # --- key-side gather: one-hot over the vocab, ONE MXU matmul with M = N*TB -------
    vk_iota = jax.lax.broadcasted_iota(jnp.int32, (F, Vk), 1)
    oh_k = (keys_flat == vk_iota).astype(mxu_dtype)                           # (F, Vk)
    gathered_k = jnp.dot(oh_k, kemb_ref[...],
                         preferred_element_type=jnp.float32)                  # (F, Dk) f32

    # --- value-side one-hot (weighted by the softmax below) ---------------------------
    vv_iota = jax.lax.broadcasted_iota(jnp.int32, (F, Vv), 1)
    oh_v = (vals_flat == vv_iota).astype(jnp.float32)                         # (F, Vv)

    # --- per-position scores + length-masked softmax over the N key positions --------
    # N is a small structural constant; these loops touch (TB, ·) tiles only.
    neg_big = jnp.float32(-1e30)
    s_list = []
    for n in range(N):
        g_n = gathered_k[n * TB:(n + 1) * TB, :]                              # (TB, Dk)
        s_n = jnp.sum(g_n * q, axis=-1, keepdims=True)                        # (TB, 1)
        s_list.append(jnp.where(plen > n, s_n, neg_big))

    m = s_list[0]
    for n in range(1, N):
        m = jnp.maximum(m, s_list[n])                                         # (TB, 1)

    denom = jnp.zeros((TB, 1), jnp.float32)
    e_list = []
    for n in range(N):
        e_n = jnp.where(plen > n, jnp.exp(s_list[n] - m), jnp.float32(0.0))
        e_list.append(e_n)
        denom = denom + e_n
    # Clamp handles pair_length == 0 (returns zeros instead of NaN).
    inv = pl.reciprocal(jnp.maximum(denom, jnp.float32(1e-30)), approx=True)  # (TB, 1)

    # --- scatter probabilities onto the value vocab, ONE MXU matmul -------------------
    pv = jnp.zeros((TB, Vv), jnp.float32)
    for n in range(N):
        p_n = e_list[n] * inv                                                 # (TB, 1)
        pv = pv + p_n * oh_v[n * TB:(n + 1) * TB, :]                          # (TB, Vv)

    o_ref[...] = jnp.dot(pv.astype(mxu_dtype), vemb_ref[...],
                         preferred_element_type=jnp.float32).astype(o_ref.dtype)


def kv_memory_forward(keys, values, pair_length, query, key_emb, value_emb,
                      *, batch_block=256, mxu_dtype=jnp.bfloat16):
    """KVMemory forward.

    keys, values : (B, N) int ids      pair_length : (B,) int
    query        : (B, Dk) float32     key_emb : (Vk, Dk)    value_emb : (Vv, Dv)
    Returns (B, Dv) float32.
    """
    assert batch_block % 8 == 0
    B, N = keys.shape
    Vk, Dk = key_emb.shape
    Vv, Dv = value_emb.shape

    # Batch tile: as large as batch_block but no bigger than the (8-rounded) batch,
    # so tiny batches are not over-padded and large batches keep >= 2 grid steps.
    TB = int(min(batch_block, pl.cdiv(B, 8) * 8))
    TB = max(8, (TB // 8) * 8)
    Bp = pl.cdiv(B, TB) * TB
    pad = Bp - B

    keys_i = keys.astype(jnp.int32)
    values_i = values.astype(jnp.int32)
    plen_i = pair_length.astype(jnp.int32)
    q = query.astype(jnp.float32)
    if pad:  # only when B % TB != 0
        keys_i = jnp.pad(keys_i, ((0, pad), (0, 0)))
        values_i = jnp.pad(values_i, ((0, pad), (0, 0)))
        plen_i = jnp.pad(plen_i, (0, pad))
        q = jnp.pad(q, ((0, pad), (0, 0)))

    # One fused int32 input (single DMA per grid step):
    #   rows [0:N] = keys^T, rows [N:2N] = values^T, row [2N] = pair_length.
    ints = jnp.concatenate([keys_i.T, values_i.T, plen_i[None, :]], axis=0)   # (2N+1, Bp)
    ints = ints[:, :, None]                                                   # (2N+1, Bp, 1)

    out = pl.pallas_call(
        _kv_memory_kernel,
        out_shape=jax.ShapeDtypeStruct((Bp, Dv), jnp.float32),
        grid_spec=pltpu.PrefetchScalarGridSpec(
            num_scalar_prefetch=0,
            grid=(Bp // TB,),
            in_specs=[
                pl.BlockSpec((2 * N + 1, TB, 1), lambda i: (0, i, 0)),  # fused int ids
                pl.BlockSpec((TB, Dk), lambda i: (i, 0)),               # query
                # Constant-index embedding tables stay VMEM-resident across steps.
                # (For large vocabularies, add pipeline_mode=pl.Buffered(1) here to
                #  avoid double-buffering the tables.)
                pl.BlockSpec((Vk, Dk), lambda i: (0, 0)),               # key table
                pl.BlockSpec((Vv, Dv), lambda i: (0, 0)),               # value table
            ],
            out_specs=pl.BlockSpec((TB, Dv), lambda i: (i, 0)),
        ),
        compiler_params=pltpu.CompilerParams(
            dimension_semantics=("parallel",)),
    )(ints, q, key_emb.astype(mxu_dtype), value_emb.astype(mxu_dtype))

    return out[:B]


def _reference(keys, values, pair_length, query, key_emb, value_emb):
    keys_e = key_emb[keys]
    values_e = value_emb[values]
    scores = jnp.einsum("bd,bnd->bn", query, keys_e)
    n = keys.shape[1]
    mask = jnp.arange(n)[None, :] < pair_length[:, None]
    s = jnp.where(mask, scores, -1e30)
    p = jax.nn.softmax(s, axis=1) * mask
    p = p / jnp.sum(p, axis=1, keepdims=True)
    return jnp.einsum("bn,bnd->bd", p, values_e)


if __name__ == "__main__":
    # Config: vocab(num_keys)=16, vocab(num_values)=16, key_size=hidden=32, value_size=32
    B, N, Dk, Dv = 2, 8, 32, 32
    NUM_KEY_IDS, NUM_VALUE_IDS = 16, 16

    root = jax.random.PRNGKey(0)
    k0, k1, k2, k3, k4 = jax.random.split(root, 5)

    key_emb = jax.random.normal(k0, (NUM_KEY_IDS, Dk), dtype=jnp.float32)
    value_emb = jax.random.normal(k1, (NUM_VALUE_IDS, Dv), dtype=jnp.float32)
    keys = jax.random.randint(k2, (B, N), 0, NUM_KEY_IDS, dtype=jnp.int32)
    values = jax.random.randint(k3, (B, N), 0, NUM_VALUE_IDS, dtype=jnp.int32)
    query = jax.random.normal(k4, (B, Dk), dtype=jnp.float32)
    pair_length = jnp.array([5, 8], dtype=jnp.int32)

    ref = _reference(keys, values, pair_length, query, key_emb, value_emb)

    # Exact-precision path (float32 MXU operands): tight tolerance (approx recip only).
    out_f32 = kv_memory_forward(keys, values, pair_length, query, key_emb, value_emb,
                                mxu_dtype=jnp.float32)
    out_f32 = jax.block_until_ready(out_f32)
    assert out_f32.shape == (B, Dv)
    assert jnp.allclose(out_f32, ref, atol=5e-3, rtol=5e-3), \
        float(jnp.max(jnp.abs(out_f32 - ref)))

    # Default path (bfloat16 MXU operands, recommended on v6e/v7x): bf16-level tolerance.
    out_bf16 = kv_memory_forward(keys, values, pair_length, query, key_emb, value_emb)
    out_bf16 = jax.block_until_ready(out_bf16)
    assert out_bf16.shape == (B, Dv)
    assert jnp.allclose(out_bf16, ref, atol=0.15, rtol=0.15), \
        float(jnp.max(jnp.abs(out_bf16 - ref)))

    print("KERNEL_OK")
</pallas_src>

<mosaic_0001>
module attributes {stable_mosaic.version = 11 : i64} {
  func.func @_kv_memory_kernel(%arg0: i32, %arg1: memref<17x8x1xi32, #tpu.memory_space<vmem>>, %arg2: memref<8x32xf32, #tpu.memory_space<vmem>>, %arg3: memref<16x32xf32, #tpu.memory_space<vmem>>, %arg4: memref<16x32xf32, #tpu.memory_space<vmem>>, %arg5: memref<8x32xf32, #tpu.memory_space<vmem>>) attributes {dimension_semantics = [#tpu.dimension_semantics<parallel>], iteration_bounds = array<i64: 1>, scalar_prefetch = 0 : i64, scratch_operands = 0 : i64, tpu.core_type = #tpu.core_type<tc>, window_params = [{transform_indices = @transform_0, window_bounds = array<i64: 17, 8, 1>}, {transform_indices = @transform_1, window_bounds = array<i64: 8, 32>}, {pipeline_mode = #tpu.pipeline_mode<synchronous>, transform_indices = @transform_2, window_bounds = array<i64: 16, 32>}, {pipeline_mode = #tpu.pipeline_mode<synchronous>, transform_indices = @transform_3, window_bounds = array<i64: 16, 32>}, {transform_indices = @transform_4, window_bounds = array<i64: 8, 32>}]} {
    %c0 = arith.constant 0 : index
    %c0_0 = arith.constant 0 : index
    %c0_1 = arith.constant 0 : index
    %0 = vector.load %arg1[%c0, %c0_0, %c0_1] : memref<17x8x1xi32, #tpu.memory_space<vmem>>, vector<1x8x1xi32>
    %1 = vector.shape_cast %0 : vector<1x8x1xi32> to vector<8x1xi32>
    %c1 = arith.constant 1 : index
    %c0_2 = arith.constant 0 : index
    %c0_3 = arith.constant 0 : index
    %2 = vector.load %arg1[%c1, %c0_2, %c0_3] : memref<17x8x1xi32, #tpu.memory_space<vmem>>, vector<1x8x1xi32>
    %3 = vector.shape_cast %2 : vector<1x8x1xi32> to vector<8x1xi32>
    %c2 = arith.constant 2 : index
    %c0_4 = arith.constant 0 : index
    %c0_5 = arith.constant 0 : index
    %4 = vector.load %arg1[%c2, %c0_4, %c0_5] : memref<17x8x1xi32, #tpu.memory_space<vmem>>, vector<1x8x1xi32>
    %5 = vector.shape_cast %4 : vector<1x8x1xi32> to vector<8x1xi32>
    %c3 = arith.constant 3 : index
    %c0_6 = arith.constant 0 : index
    %c0_7 = arith.constant 0 : index
    %6 = vector.load %arg1[%c3, %c0_6, %c0_7] : memref<17x8x1xi32, #tpu.memory_space<vmem>>, vector<1x8x1xi32>
    %7 = vector.shape_cast %6 : vector<1x8x1xi32> to vector<8x1xi32>
    %c4 = arith.constant 4 : index
    %c0_8 = arith.constant 0 : index
    %c0_9 = arith.constant 0 : index
    %8 = vector.load %arg1[%c4, %c0_8, %c0_9] : memref<17x8x1xi32, #tpu.memory_space<vmem>>, vector<1x8x1xi32>
    %9 = vector.shape_cast %8 : vector<1x8x1xi32> to vector<8x1xi32>
    %c5 = arith.constant 5 : index
    %c0_10 = arith.constant 0 : index
    %c0_11 = arith.constant 0 : index
    %10 = vector.load %arg1[%c5, %c0_10, %c0_11] : memref<17x8x1xi32, #tpu.memory_space<vmem>>, vector<1x8x1xi32>
    %11 = vector.shape_cast %10 : vector<1x8x1xi32> to vector<8x1xi32>
    %c6 = arith.constant 6 : index
    %c0_12 = arith.constant 0 : index
    %c0_13 = arith.constant 0 : index
    %12 = vector.load %arg1[%c6, %c0_12, %c0_13] : memref<17x8x1xi32, #tpu.memory_space<vmem>>, vector<1x8x1xi32>
    %13 = vector.shape_cast %12 : vector<1x8x1xi32> to vector<8x1xi32>
    %c7 = arith.constant 7 : index
    %c0_14 = arith.constant 0 : index
    %c0_15 = arith.constant 0 : index
    %14 = vector.load %arg1[%c7, %c0_14, %c0_15] : memref<17x8x1xi32, #tpu.memory_space<vmem>>, vector<1x8x1xi32>
    %15 = vector.shape_cast %14 : vector<1x8x1xi32> to vector<8x1xi32>
    %16 = tpu.concatenate %1, %3, %5, %7, %9, %11, %13, %15 in 0 : vector<8x1xi32>, vector<8x1xi32>, vector<8x1xi32>, vector<8x1xi32>, vector<8x1xi32>, vector<8x1xi32>, vector<8x1xi32>, vector<8x1xi32> -> vector<64x1xi32>
    %c8 = arith.constant 8 : index
    %c0_16 = arith.constant 0 : index
    %c0_17 = arith.constant 0 : index
    %17 = vector.load %arg1[%c8, %c0_16, %c0_17] : memref<17x8x1xi32, #tpu.memory_space<vmem>>, vector<1x8x1xi32>
    %18 = vector.shape_cast %17 : vector<1x8x1xi32> to vector<8x1xi32>
    %c9 = arith.constant 9 : index
    %c0_18 = arith.constant 0 : index
    %c0_19 = arith.constant 0 : index
    %19 = vector.load %arg1[%c9, %c0_18, %c0_19] : memref<17x8x1xi32, #tpu.memory_space<vmem>>, vector<1x8x1xi32>
    %20 = vector.shape_cast %19 : vector<1x8x1xi32> to vector<8x1xi32>
    %c10 = arith.constant 10 : index
    %c0_20 = arith.constant 0 : index
    %c0_21 = arith.constant 0 : index
    %21 = vector.load %arg1[%c10, %c0_20, %c0_21] : memref<17x8x1xi32, #tpu.memory_space<vmem>>, vector<1x8x1xi32>
    %22 = vector.shape_cast %21 : vector<1x8x1xi32> to vector<8x1xi32>
    %c11 = arith.constant 11 : index
    %c0_22 = arith.constant 0 : index
    %c0_23 = arith.constant 0 : index
    %23 = vector.load %arg1[%c11, %c0_22, %c0_23] : memref<17x8x1xi32, #tpu.memory_space<vmem>>, vector<1x8x1xi32>
    %24 = vector.shape_cast %23 : vector<1x8x1xi32> to vector<8x1xi32>
    %c12 = arith.constant 12 : index
    %c0_24 = arith.constant 0 : index
    %c0_25 = arith.constant 0 : index
    %25 = vector.load %arg1[%c12, %c0_24, %c0_25] : memref<17x8x1xi32, #tpu.memory_space<vmem>>, vector<1x8x1xi32>
    %26 = vector.shape_cast %25 : vector<1x8x1xi32> to vector<8x1xi32>
    %c13 = arith.constant 13 : index
    %c0_26 = arith.constant 0 : index
    %c0_27 = arith.constant 0 : index
    %27 = vector.load %arg1[%c13, %c0_26, %c0_27] : memref<17x8x1xi32, #tpu.memory_space<vmem>>, vector<1x8x1xi32>
    %28 = vector.shape_cast %27 : vector<1x8x1xi32> to vector<8x1xi32>
    %c14 = arith.constant 14 : index
    %c0_28 = arith.constant 0 : index
    %c0_29 = arith.constant 0 : index
    %29 = vector.load %arg1[%c14, %c0_28, %c0_29] : memref<17x8x1xi32, #tpu.memory_space<vmem>>, vector<1x8x1xi32>
    %30 = vector.shape_cast %29 : vector<1x8x1xi32> to vector<8x1xi32>
    %c15 = arith.constant 15 : index
    %c0_30 = arith.constant 0 : index
    %c0_31 = arith.constant 0 : index
    %31 = vector.load %arg1[%c15, %c0_30, %c0_31] : memref<17x8x1xi32, #tpu.memory_space<vmem>>, vector<1x8x1xi32>
    %32 = vector.shape_cast %31 : vector<1x8x1xi32> to vector<8x1xi32>
    %33 = tpu.concatenate %18, %20, %22, %24, %26, %28, %30, %32 in 0 : vector<8x1xi32>, vector<8x1xi32>, vector<8x1xi32>, vector<8x1xi32>, vector<8x1xi32>, vector<8x1xi32>, vector<8x1xi32>, vector<8x1xi32> -> vector<64x1xi32>
    %c16 = arith.constant 16 : index
    %c0_32 = arith.constant 0 : index
    %c0_33 = arith.constant 0 : index
    %34 = vector.load %arg1[%c16, %c0_32, %c0_33] : memref<17x8x1xi32, #tpu.memory_space<vmem>>, vector<1x8x1xi32>
    %35 = vector.shape_cast %34 : vector<1x8x1xi32> to vector<8x1xi32>
    %c0_34 = arith.constant 0 : index
    %c0_35 = arith.constant 0 : index
    %36 = vector.load %arg2[%c0_34, %c0_35] : memref<8x32xf32, #tpu.memory_space<vmem>>, vector<8x32xf32>
    %37 = tpu.iota {dimensions = array<i32: 1>} : vector<64x16xi32>
    %38 = vector.broadcast %16 : vector<64x1xi32> to vector<64x16xi32>
    %39 = arith.cmpi eq, %38, %37 : vector<64x16xi32>
    %40 = arith.extui %39 : vector<64x16xi1> to vector<64x16xi32>
    %41 = arith.sitofp %40 : vector<64x16xi32> to vector<64x16xf32>
    %c0_36 = arith.constant 0 : index
    %c0_37 = arith.constant 0 : index
    %42 = vector.load %arg3[%c0_36, %c0_37] : memref<16x32xf32, #tpu.memory_space<vmem>>, vector<16x32xf32>
    %cst = arith.constant dense<0.000000e+00> : vector<64x32xf32>
    %43 = tpu.matmul %41, %42, %cst {dimension_numbers = #tpu.dot_dimension_numbers<[1], [0], [0], [1], [0, 0, 1, 1], [], []>} : vector<64x16xf32>, vector<16x32xf32>, vector<64x32xf32> -> vector<64x32xf32>
    %44 = tpu.iota {dimensions = array<i32: 1>} : vector<64x16xi32>
    %45 = vector.broadcast %33 : vector<64x1xi32> to vector<64x16xi32>
    %46 = arith.cmpi eq, %45, %44 : vector<64x16xi32>
    %47 = arith.extui %46 : vector<64x16xi1> to vector<64x16xi32>
    %48 = arith.sitofp %47 : vector<64x16xi32> to vector<64x16xf32>
    %49 = vector.extract_strided_slice %43 {offsets = [0, 0], sizes = [8, 32], strides = [1, 1]} : vector<64x32xf32> to vector<8x32xf32>
    %50 = arith.mulf %49, %36 : vector<8x32xf32>
    %cst_38 = arith.constant dense<0.000000e+00> : vector<8xf32>
    %51 = vector.multi_reduction <add>, %50, %cst_38 [1] : vector<8x32xf32> to vector<8xf32>
    %52 = vector.shape_cast %51 : vector<8xf32> to vector<8x1xf32>
    %c0_i32 = arith.constant 0 : i32
    %53 = vector.broadcast %c0_i32 : i32 to vector<8x1xi32>
    %54 = arith.cmpi sgt, %35, %53 : vector<8x1xi32>
    %cst_39 = arith.constant -1.000000e+30 : f32
    %55 = vector.broadcast %cst_39 : f32 to vector<8x1xf32>
    %56 = arith.select %54, %52, %55 : vector<8x1xi1>, vector<8x1xf32>
    %57 = vector.extract_strided_slice %43 {offsets = [8, 0], sizes = [8, 32], strides = [1, 1]} : vector<64x32xf32> to vector<8x32xf32>
    %58 = arith.mulf %57, %36 : vector<8x32xf32>
    %cst_40 = arith.constant dense<0.000000e+00> : vector<8xf32>
    %59 = vector.multi_reduction <add>, %58, %cst_40 [1] : vector<8x32xf32> to vector<8xf32>
    %60 = vector.shape_cast %59 : vector<8xf32> to vector<8x1xf32>
    %c1_i32 = arith.constant 1 : i32
    %61 = vector.broadcast %c1_i32 : i32 to vector<8x1xi32>
    %62 = arith.cmpi sgt, %35, %61 : vector<8x1xi32>
    %cst_41 = arith.constant -1.000000e+30 : f32
    %63 = vector.broadcast %cst_41 : f32 to vector<8x1xf32>
    %64 = arith.select %62, %60, %63 : vector<8x1xi1>, vector<8x1xf32>
    %65 = vector.extract_strided_slice %43 {offsets = [16, 0], sizes = [8, 32], strides = [1, 1]} : vector<64x32xf32> to vector<8x32xf32>
    %66 = arith.mulf %65, %36 : vector<8x32xf32>
    %cst_42 = arith.constant dense<0.000000e+00> : vector<8xf32>
    %67 = vector.multi_reduction <add>, %66, %cst_42 [1] : vector<8x32xf32> to vector<8xf32>
    %68 = vector.shape_cast %67 : vector<8xf32> to vector<8x1xf32>
    %c2_i32 = arith.constant 2 : i32
    %69 = vector.broadcast %c2_i32 : i32 to vector<8x1xi32>
    %70 = arith.cmpi sgt, %35, %69 : vector<8x1xi32>
    %cst_43 = arith.constant -1.000000e+30 : f32
    %71 = vector.broadcast %cst_43 : f32 to vector<8x1xf32>
    %72 = arith.select %70, %68, %71 : vector<8x1xi1>, vector<8x1xf32>
    %73 = vector.extract_strided_slice %43 {offsets = [24, 0], sizes = [8, 32], strides = [1, 1]} : vector<64x32xf32> to vector<8x32xf32>
    %74 = arith.mulf %73, %36 : vector<8x32xf32>
    %cst_44 = arith.constant dense<0.000000e+00> : vector<8xf32>
    %75 = vector.multi_reduction <add>, %74, %cst_44 [1] : vector<8x32xf32> to vector<8xf32>
    %76 = vector.shape_cast %75 : vector<8xf32> to vector<8x1xf32>
    %c3_i32 = arith.constant 3 : i32
    %77 = vector.broadcast %c3_i32 : i32 to vector<8x1xi32>
    %78 = arith.cmpi sgt, %35, %77 : vector<8x1xi32>
    %cst_45 = arith.constant -1.000000e+30 : f32
    %79 = vector.broadcast %cst_45 : f32 to vector<8x1xf32>
    %80 = arith.select %78, %76, %79 : vector<8x1xi1>, vector<8x1xf32>
    %81 = vector.extract_strided_slice %43 {offsets = [32, 0], sizes = [8, 32], strides = [1, 1]} : vector<64x32xf32> to vector<8x32xf32>
    %82 = arith.mulf %81, %36 : vector<8x32xf32>
    %cst_46 = arith.constant dense<0.000000e+00> : vector<8xf32>
    %83 = vector.multi_reduction <add>, %82, %cst_46 [1] : vector<8x32xf32> to vector<8xf32>
    %84 = vector.shape_cast %83 : vector<8xf32> to vector<8x1xf32>
    %c4_i32 = arith.constant 4 : i32
    %85 = vector.broadcast %c4_i32 : i32 to vector<8x1xi32>
    %86 = arith.cmpi sgt, %35, %85 : vector<8x1xi32>
    %cst_47 = arith.constant -1.000000e+30 : f32
    %87 = vector.broadcast %cst_47 : f32 to vector<8x1xf32>
    %88 = arith.select %86, %84, %87 : vector<8x1xi1>, vector<8x1xf32>
    %89 = vector.extract_strided_slice %43 {offsets = [40, 0], sizes = [8, 32], strides = [1, 1]} : vector<64x32xf32> to vector<8x32xf32>
    %90 = arith.mulf %89, %36 : vector<8x32xf32>
    %cst_48 = arith.constant dense<0.000000e+00> : vector<8xf32>
    %91 = vector.multi_reduction <add>, %90, %cst_48 [1] : vector<8x32xf32> to vector<8xf32>
    %92 = vector.shape_cast %91 : vector<8xf32> to vector<8x1xf32>
    %c5_i32 = arith.constant 5 : i32
    %93 = vector.broadcast %c5_i32 : i32 to vector<8x1xi32>
    %94 = arith.cmpi sgt, %35, %93 : vector<8x1xi32>
    %cst_49 = arith.constant -1.000000e+30 : f32
    %95 = vector.broadcast %cst_49 : f32 to vector<8x1xf32>
    %96 = arith.select %94, %92, %95 : vector<8x1xi1>, vector<8x1xf32>
    %97 = vector.extract_strided_slice %43 {offsets = [48, 0], sizes = [8, 32], strides = [1, 1]} : vector<64x32xf32> to vector<8x32xf32>
    %98 = arith.mulf %97, %36 : vector<8x32xf32>
    %cst_50 = arith.constant dense<0.000000e+00> : vector<8xf32>
    %99 = vector.multi_reduction <add>, %98, %cst_50 [1] : vector<8x32xf32> to vector<8xf32>
    %100 = vector.shape_cast %99 : vector<8xf32> to vector<8x1xf32>
    %c6_i32 = arith.constant 6 : i32
    %101 = vector.broadcast %c6_i32 : i32 to vector<8x1xi32>
    %102 = arith.cmpi sgt, %35, %101 : vector<8x1xi32>
    %cst_51 = arith.constant -1.000000e+30 : f32
    %103 = vector.broadcast %cst_51 : f32 to vector<8x1xf32>
    %104 = arith.select %102, %100, %103 : vector<8x1xi1>, vector<8x1xf32>
    %105 = vector.extract_strided_slice %43 {offsets = [56, 0], sizes = [8, 32], strides = [1, 1]} : vector<64x32xf32> to vector<8x32xf32>
    %106 = arith.mulf %105, %36 : vector<8x32xf32>
    %cst_52 = arith.constant dense<0.000000e+00> : vector<8xf32>
    %107 = vector.multi_reduction <add>, %106, %cst_52 [1] : vector<8x32xf32> to vector<8xf32>
    %108 = vector.shape_cast %107 : vector<8xf32> to vector<8x1xf32>
    %c7_i32 = arith.constant 7 : i32
    %109 = vector.broadcast %c7_i32 : i32 to vector<8x1xi32>
    %110 = arith.cmpi sgt, %35, %109 : vector<8x1xi32>
    %cst_53 = arith.constant -1.000000e+30 : f32
    %111 = vector.broadcast %cst_53 : f32 to vector<8x1xf32>
    %112 = arith.select %110, %108, %111 : vector<8x1xi1>, vector<8x1xf32>
    %113 = arith.maximumf %56, %64 : vector<8x1xf32>
    %114 = arith.maximumf %113, %72 : vector<8x1xf32>
    %115 = arith.maximumf %114, %80 : vector<8x1xf32>
    %116 = arith.maximumf %115, %88 : vector<8x1xf32>
    %117 = arith.maximumf %116, %96 : vector<8x1xf32>
    %118 = arith.maximumf %117, %104 : vector<8x1xf32>
    %119 = arith.maximumf %118, %112 : vector<8x1xf32>
    %cst_54 = arith.constant 0.000000e+00 : f32
    %120 = vector.broadcast %cst_54 : f32 to vector<8x1xf32>
    %c0_i32_55 = arith.constant 0 : i32
    %121 = vector.broadcast %c0_i32_55 : i32 to vector<8x1xi32>
    %122 = arith.cmpi sgt, %35, %121 : vector<8x1xi32>
    %123 = arith.subf %56, %119 : vector<8x1xf32>
    %124 = math.exp %123 : vector<8x1xf32>
    %cst_56 = arith.constant 0.000000e+00 : f32
    %125 = vector.broadcast %cst_56 : f32 to vector<8x1xf32>
    %126 = arith.select %122, %124, %125 : vector<8x1xi1>, vector<8x1xf32>
    %127 = arith.addf %120, %126 : vector<8x1xf32>
    %c1_i32_57 = arith.constant 1 : i32
    %128 = vector.broadcast %c1_i32_57 : i32 to vector<8x1xi32>
    %129 = arith.cmpi sgt, %35, %128 : vector<8x1xi32>
    %130 = arith.subf %64, %119 : vector<8x1xf32>
    %131 = math.exp %130 : vector<8x1xf32>
    %cst_58 = arith.constant 0.000000e+00 : f32
    %132 = vector.broadcast %cst_58 : f32 to vector<8x1xf32>
    %133 = arith.select %129, %131, %132 : vector<8x1xi1>, vector<8x1xf32>
    %134 = arith.addf %127, %133 : vector<8x1xf32>
    %c2_i32_59 = arith.constant 2 : i32
    %135 = vector.broadcast %c2_i32_59 : i32 to vector<8x1xi32>
    %136 = arith.cmpi sgt, %35, %135 : vector<8x1xi32>
    %137 = arith.subf %72, %119 : vector<8x1xf32>
    %138 = math.exp %137 : vector<8x1xf32>
    %cst_60 = arith.constant 0.000000e+00 : f32
    %139 = vector.broadcast %cst_60 : f32 to vector<8x1xf32>
    %140 = arith.select %136, %138, %139 : vector<8x1xi1>, vector<8x1xf32>
    %141 = arith.addf %134, %140 : vector<8x1xf32>
    %c3_i32_61 = arith.constant 3 : i32
    %142 = vector.broadcast %c3_i32_61 : i32 to vector<8x1xi32>
    %143 = arith.cmpi sgt, %35, %142 : vector<8x1xi32>
    %144 = arith.subf %80, %119 : vector<8x1xf32>
    %145 = math.exp %144 : vector<8x1xf32>
    %cst_62 = arith.constant 0.000000e+00 : f32
    %146 = vector.broadcast %cst_62 : f32 to vector<8x1xf32>
    %147 = arith.select %143, %145, %146 : vector<8x1xi1>, vector<8x1xf32>
    %148 = arith.addf %141, %147 : vector<8x1xf32>
    %c4_i32_63 = arith.constant 4 : i32
    %149 = vector.broadcast %c4_i32_63 : i32 to vector<8x1xi32>
    %150 = arith.cmpi sgt, %35, %149 : vector<8x1xi32>
    %151 = arith.subf %88, %119 : vector<8x1xf32>
    %152 = math.exp %151 : vector<8x1xf32>
    %cst_64 = arith.constant 0.000000e+00 : f32
    %153 = vector.broadcast %cst_64 : f32 to vector<8x1xf32>
    %154 = arith.select %150, %152, %153 : vector<8x1xi1>, vector<8x1xf32>
    %155 = arith.addf %148, %154 : vector<8x1xf32>
    %c5_i32_65 = arith.constant 5 : i32
    %156 = vector.broadcast %c5_i32_65 : i32 to vector<8x1xi32>
    %157 = arith.cmpi sgt, %35, %156 : vector<8x1xi32>
    %158 = arith.subf %96, %119 : vector<8x1xf32>
    %159 = math.exp %158 : vector<8x1xf32>
    %cst_66 = arith.constant 0.000000e+00 : f32
    %160 = vector.broadcast %cst_66 : f32 to vector<8x1xf32>
    %161 = arith.select %157, %159, %160 : vector<8x1xi1>, vector<8x1xf32>
    %162 = arith.addf %155, %161 : vector<8x1xf32>
    %c6_i32_67 = arith.constant 6 : i32
    %163 = vector.broadcast %c6_i32_67 : i32 to vector<8x1xi32>
    %164 = arith.cmpi sgt, %35, %163 : vector<8x1xi32>
    %165 = arith.subf %104, %119 : vector<8x1xf32>
    %166 = math.exp %165 : vector<8x1xf32>
    %cst_68 = arith.constant 0.000000e+00 : f32
    %167 = vector.broadcast %cst_68 : f32 to vector<8x1xf32>
    %168 = arith.select %164, %166, %167 : vector<8x1xi1>, vector<8x1xf32>
    %169 = arith.addf %162, %168 : vector<8x1xf32>
    %c7_i32_69 = arith.constant 7 : i32
    %170 = vector.broadcast %c7_i32_69 : i32 to vector<8x1xi32>
    %171 = arith.cmpi sgt, %35, %170 : vector<8x1xi32>
    %172 = arith.subf %112, %119 : vector<8x1xf32>
    %173 = math.exp %172 : vector<8x1xf32>
    %cst_70 = arith.constant 0.000000e+00 : f32
    %174 = vector.broadcast %cst_70 : f32 to vector<8x1xf32>
    %175 = arith.select %171, %173, %174 : vector<8x1xi1>, vector<8x1xf32>
    %176 = arith.addf %169, %175 : vector<8x1xf32>
    %cst_71 = arith.constant 1.000000e-30 : f32
    %177 = vector.broadcast %cst_71 : f32 to vector<8x1xf32>
    %178 = arith.maximumf %176, %177 : vector<8x1xf32>
    %179 = tpu.reciprocal %178 {approx = true} : vector<8x1xf32> -> vector<8x1xf32>
    %cst_72 = arith.constant 0.000000e+00 : f32
    %180 = vector.broadcast %cst_72 : f32 to vector<8x16xf32>
    %181 = arith.mulf %126, %179 : vector<8x1xf32>
    %182 = vector.extract_strided_slice %48 {offsets = [0, 0], sizes = [8, 16], strides = [1, 1]} : vector<64x16xf32> to vector<8x16xf32>
    %183 = vector.broadcast %181 : vector<8x1xf32> to vector<8x16xf32>
    %184 = arith.mulf %183, %182 : vector<8x16xf32>
    %185 = arith.addf %180, %184 : vector<8x16xf32>
    %186 = arith.mulf %133, %179 : vector<8x1xf32>
    %187 = vector.extract_strided_slice %48 {offsets = [8, 0], sizes = [8, 16], strides = [1, 1]} : vector<64x16xf32> to vector<8x16xf32>
    %188 = vector.broadcast %186 : vector<8x1xf32> to vector<8x16xf32>
    %189 = arith.mulf %188, %187 : vector<8x16xf32>
    %190 = arith.addf %185, %189 : vector<8x16xf32>
    %191 = arith.mulf %140, %179 : vector<8x1xf32>
    %192 = vector.extract_strided_slice %48 {offsets = [16, 0], sizes = [8, 16], strides = [1, 1]} : vector<64x16xf32> to vector<8x16xf32>
    %193 = vector.broadcast %191 : vector<8x1xf32> to vector<8x16xf32>
    %194 = arith.mulf %193, %192 : vector<8x16xf32>
    %195 = arith.addf %190, %194 : vector<8x16xf32>
    %196 = arith.mulf %147, %179 : vector<8x1xf32>
    %197 = vector.extract_strided_slice %48 {offsets = [24, 0], sizes = [8, 16], strides = [1, 1]} : vector<64x16xf32> to vector<8x16xf32>
    %198 = vector.broadcast %196 : vector<8x1xf32> to vector<8x16xf32>
    %199 = arith.mulf %198, %197 : vector<8x16xf32>
    %200 = arith.addf %195, %199 : vector<8x16xf32>
    %201 = arith.mulf %154, %179 : vector<8x1xf32>
    %202 = vector.extract_strided_slice %48 {offsets = [32, 0], sizes = [8, 16], strides = [1, 1]} : vector<64x16xf32> to vector<8x16xf32>
    %203 = vector.broadcast %201 : vector<8x1xf32> to vector<8x16xf32>
    %204 = arith.mulf %203, %202 : vector<8x16xf32>
    %205 = arith.addf %200, %204 : vector<8x16xf32>
    %206 = arith.mulf %161, %179 : vector<8x1xf32>
    %207 = vector.extract_strided_slice %48 {offsets = [40, 0], sizes = [8, 16], strides = [1, 1]} : vector<64x16xf32> to vector<8x16xf32>
    %208 = vector.broadcast %206 : vector<8x1xf32> to vector<8x16xf32>
    %209 = arith.mulf %208, %207 : vector<8x16xf32>
    %210 = arith.addf %205, %209 : vector<8x16xf32>
    %211 = arith.mulf %168, %179 : vector<8x1xf32>
    %212 = vector.extract_strided_slice %48 {offsets = [48, 0], sizes = [8, 16], strides = [1, 1]} : vector<64x16xf32> to vector<8x16xf32>
    %213 = vector.broadcast %211 : vector<8x1xf32> to vector<8x16xf32>
    %214 = arith.mulf %213, %212 : vector<8x16xf32>
    %215 = arith.addf %210, %214 : vector<8x16xf32>
    %216 = arith.mulf %175, %179 : vector<8x1xf32>
    %217 = vector.extract_strided_slice %48 {offsets = [56, 0], sizes = [8, 16], strides = [1, 1]} : vector<64x16xf32> to vector<8x16xf32>
    %218 = vector.broadcast %216 : vector<8x1xf32> to vector<8x16xf32>
    %219 = arith.mulf %218, %217 : vector<8x16xf32>
    %220 = arith.addf %215, %219 : vector<8x16xf32>
    %c0_73 = arith.constant 0 : index
    %c0_74 = arith.constant 0 : index
    %221 = vector.load %arg4[%c0_73, %c0_74] : memref<16x32xf32, #tpu.memory_space<vmem>>, vector<16x32xf32>
    %cst_75 = arith.constant dense<0.000000e+00> : vector<8x32xf32>
    %222 = tpu.matmul %220, %221, %cst_75 {dimension_numbers = #tpu.dot_dimension_numbers<[1], [0], [0], [1], [0, 0, 1, 1], [], []>} : vector<8x16xf32>, vector<16x32xf32>, vector<8x32xf32> -> vector<8x32xf32>
    %c0_76 = arith.constant 0 : index
    %c0_77 = arith.constant 0 : index
    %223 = vector.load %arg5[%c0_76, %c0_77] : memref<8x32xf32, #tpu.memory_space<vmem>>, vector<8x32xf32>
    tpu.vector_store %arg5[%c0_76, %c0_77], %222 {strides = array<i32>} : memref<8x32xf32, #tpu.memory_space<vmem>>, vector<8x32xf32>,
    return
  }
  func.func @transform_0(%arg0: i32) -> (i32, i32, i32) {
    %c0_i32 = arith.constant 0 : i32
    %c0_i32_0 = arith.constant 0 : i32
    %c0_i32_1 = arith.constant 0 : i32
    return %c0_i32, %arg0, %c0_i32_0 : i32, i32, i32
  }
  func.func @transform_1(%arg0: i32) -> (i32, i32) {
    %c0_i32 = arith.constant 0 : i32
    %c0_i32_0 = arith.constant 0 : i32
    return %arg0, %c0_i32 : i32, i32
  }
  func.func @transform_2(%arg0: i32) -> (i32, i32) {
    %c0_i32 = arith.constant 0 : i32
    %c0_i32_0 = arith.constant 0 : i32
    %c0_i32_1 = arith.constant 0 : i32
    return %c0_i32, %c0_i32_0 : i32, i32
  }
  func.func @transform_3(%arg0: i32) -> (i32, i32) {
    %c0_i32 = arith.constant 0 : i32
    %c0_i32_0 = arith.constant 0 : i32
    %c0_i32_1 = arith.constant 0 : i32
    return %c0_i32, %c0_i32_0 : i32, i32
  }
  func.func @transform_4(%arg0: i32) -> (i32, i32) {
    %c0_i32 = arith.constant 0 : i32
    %c0_i32_0 = arith.constant 0 : i32
    return %arg0, %c0_i32 : i32, i32
  }
}

</mosaic_0001>

<llo_original>
// kernel: tpu_custom_call.1
$region0: #{tpu_custom_call.1}
  #allocation0 [shape = 'u32[]', space=smem, size = 0x4, offset = 0x4, fixed_abs, tag = 'smem constant byte address 0x4 - core index']
  #allocation1 [shape = 'u32[144,128]{1,0:T(1,128)}', space=vmem, size = 0x12000, scoped, tag = 'internal scratch']
  %s0 = inlined_call_operand.vmem [shape: s32[17,8,1], index: 0, kind: input, shape index: {}]
  %s1 = inlined_call_operand.vmem [shape: f32[8,32], index: 1, kind: input, shape index: {}]
  %s2 = inlined_call_operand.vmem [shape: f32[16,32], index: 2, kind: input, shape index: {}]
  %s3 = inlined_call_operand.vmem [shape: f32[16,32], index: 3, kind: input, shape index: {}]
  %s4 = inlined_call_operand.hbm [shape: f32[8,32], index: 4, kind: output, shape index: {}]
  %s5 = sld [smem:[#allocation0]]
  $region26: #{tpu_custom_call.1} parent=0
    _
  %s7 = ssub.s32 1, %s5
  %s8 = scalar_select 0, %s7, %s5
  $region1: #{tpu_custom_call.1} parent=0
    #allocation2 [shape = 'u8[4096]{0}', space=vmem, size = 0x1000, scoped, tag = 'output window, operand 0, single buffered']
    #allocation3 [shape = 's32[1]{0}', space=sflag, size = 0x4, scoped, tag = 'scoped memory for tpu_custom_call.1']
    %9 = vsyncpa [#allocation3], 0
    // Predicated region
    $region2: #{tpu_custom_call.1} parent=1 // pred_check
      _
    $region3: #{tpu_custom_call.1} parent=1 // pred_check_branch
      %11 = sbr.rel (0) target = $region5
    $region4: #{tpu_custom_call.1} parent=1 // pred_region
      _
    $region5: #{tpu_custom_call.1} parent=1 // pred_fallthru
      _
    // Predicated region
    $region6: #{tpu_custom_call.1} parent=1 // pred_check
      _
    $region7: #{tpu_custom_call.1} parent=1 // pred_check_branch
      %13 = sbr.rel (0) target = $region9
    $region8: #{tpu_custom_call.1} parent=1 // pred_region
      _
    $region9: #{tpu_custom_call.1} parent=1 // pred_fallthru
      _
    // Predicated region
    $region10: #{tpu_custom_call.1} parent=1 // pred_check
      _
    $region11: #{tpu_custom_call.1} parent=1 // pred_check_branch
      %15 = sbr.rel (0) target = $region13
    $region12: #{tpu_custom_call.1} parent=1 // pred_region
      _
    $region13: #{tpu_custom_call.1} parent=1 // pred_fallthru
      _
    // Predicated region
    $region14: #{tpu_custom_call.1} parent=1 // pred_check
      _
    $region15: #{tpu_custom_call.1} parent=1 // pred_check_branch
      %17 = sbr.rel (0) target = $region17
    $region16: #{tpu_custom_call.1} parent=1 // pred_region
      _
    $region17: #{tpu_custom_call.1} parent=1 // pred_fallthru
      _
    %v18 = vld [vmem:[%s0] sm:$0xff]
    %s19 = scalar_lea.vmem %s0, 8
    %v20 = vld [vmem:[%s19] sm:$0xff]
    %s21 = scalar_lea.vmem %s0, 16
    %v22 = vld [vmem:[%s21] sm:$0xff]
    %s23 = scalar_lea.vmem %s0, 24
    %v24 = vld [vmem:[%s23] sm:$0xff]
    %s25 = scalar_lea.vmem %s0, 32
    %v26 = vld [vmem:[%s25] sm:$0xff]
    %s27 = scalar_lea.vmem %s0, 40
    %v28 = vld [vmem:[%s27] sm:$0xff]
    %s29 = scalar_lea.vmem %s0, 48
    %v30 = vld [vmem:[%s29] sm:$0xff]
    %s31 = scalar_lea.vmem %s0, 56
    %v32 = vld [vmem:[%s31] sm:$0xff]
    %s33 = scalar_lea.vmem %s0, 64
    %v34 = vld [vmem:[%s33] sm:$0xff]
    %s35 = scalar_lea.vmem %s0, 72
    %v36 = vld [vmem:[%s35] sm:$0xff]
    %s37 = scalar_lea.vmem %s0, 80
    %v38 = vld [vmem:[%s37] sm:$0xff]
    %s39 = scalar_lea.vmem %s0, 88
    %v40 = vld [vmem:[%s39] sm:$0xff]
    %s41 = scalar_lea.vmem %s0, 96
    %v42 = vld [vmem:[%s41] sm:$0xff]
    %s43 = scalar_lea.vmem %s0, 104
    %v44 = vld [vmem:[%s43] sm:$0xff]
    %s45 = scalar_lea.vmem %s0, 112
    %v46 = vld [vmem:[%s45] sm:$0xff]
    %s47 = scalar_lea.vmem %s0, 120
    %v48 = vld [vmem:[%s47] sm:$0xff]
    %s49 = scalar_lea.vmem %s0, 128
    %v50 = vld [vmem:[%s49] sm:$0xff]
    %v51 = vld [vmem:[%s1] sm:$0xff]
    %v52 = vlaneseq
    %v53 = vand.u32 %v52, 127
    %54 = vset.pattern.permute.xlu0 0
    %55 = vperm.xlu0 %54, %v18
    %v56 = vpop.permute.xlu0 %55
    %57 = vset.pattern.permute.xlu0 0
    %58 = vperm.xlu0 %57, %v20
    %v59 = vpop.permute.xlu0 %58
    %60 = vset.pattern.permute.xlu0 0
    %61 = vperm.xlu0 %60, %v22
    %v62 = vpop.permute.xlu0 %61
    %63 = vset.pattern.permute.xlu0 0
    %64 = vperm.xlu0 %63, %v24
    %v65 = vpop.permute.xlu0 %64
    %66 = vset.pattern.permute.xlu0 0
    %67 = vperm.xlu0 %66, %v26
    %v68 = vpop.permute.xlu0 %67
    %69 = vset.pattern.permute.xlu0 0
    %70 = vperm.xlu0 %69, %v28
    %v71 = vpop.permute.xlu0 %70
    %72 = vset.pattern.permute.xlu0 0
    %73 = vperm.xlu0 %72, %v30
    %v74 = vpop.permute.xlu0 %73
    %75 = vset.pattern.permute.xlu0 0
    %76 = vperm.xlu0 %75, %v32
    %v77 = vpop.permute.xlu0 %76
    %vm78 = vcmp.eq.s32.totalorder %v56, %v53
    %vm79 = vcmp.eq.s32.totalorder %v59, %v53
    %vm80 = vcmp.eq.s32.totalorder %v62, %v53
    %vm81 = vcmp.eq.s32.totalorder %v65, %v53
    %vm82 = vcmp.eq.s32.totalorder %v68, %v53
    %vm83 = vcmp.eq.s32.totalorder %v71, %v53
    %vm84 = vcmp.eq.s32.totalorder %v74, %v53
    %vm85 = vcmp.eq.s32.totalorder %v77, %v53
    %v86 = vsel %vm78, 1, 0
    %v87 = vsel %vm79, 1, 0
    %v88 = vsel %vm80, 1, 0
    %v89 = vsel %vm81, 1, 0
    %v90 = vsel %vm82, 1, 0
    %v91 = vsel %vm83, 1, 0
    %v92 = vsel %vm84, 1, 0
    %v93 = vsel %vm85, 1, 0
    %v94 = vcvt.s32.f32 %v86
    %v95 = vcvt.s32.f32 %v87
    %v96 = vcvt.s32.f32 %v88
    %v97 = vcvt.s32.f32 %v89
    %v98 = vcvt.s32.f32 %v90
    %v99 = vcvt.s32.f32 %v91
    %v100 = vcvt.s32.f32 %v92
    %v101 = vcvt.s32.f32 %v93
    %v102 = vld [vmem:[%s2] sm:$0xff]
    %v103 = vld [vmem:[%s2 + $0x8] sm:$0xff]
    %vm104 = vcmask 130048
    %v106 = vsel %vm104, %v94, 0
    %v109 = vsel %vm104, %v95, 0
    %v112 = vsel %vm104, %v96, 0
    %v115 = vsel %vm104, %v97, 0
    %v118 = vsel %vm104, %v98, 0
    %v121 = vsel %vm104, %v99, 0
    %v124 = vsel %vm104, %v100, 0
    %v127 = vsel %vm104, %v101, 0
    %129 = vmatprep.subr.mxu0 0.0
    %130 = vmatpush1.msra.mxu0 %v102
    %131 = vmatprep.subr.mxu0 0.0
    %132 = vmatpush1.msra.mxu0 %v103
    %133 = vmatprep.subr.mxu0 0.0
    %134 = vmatpush1.msra.mxu0 0.0
    %135 = vmatprep.subr.mxu0 0.0
    %136 = vmatpush1.msra.mxu0 0.0
    %137 = vmatprep.subr.mxu0 0.0
    %138 = vmatpush1.msra.mxu0 0.0
    %139 = vmatprep.subr.mxu0 0.0
    %140 = vmatpush1.msra.mxu0 0.0
    %141 = vmatprep.subr.mxu0 0.0
    %142 = vmatpush1.msra.mxu0 0.0
    %143 = vmatprep.subr.mxu0 0.0
    %144 = vmatpush1.msra.mxu0 0.0
    %145 = vmatprep.subr.mxu0 0.0
    %146 = vmatpush1.msra.mxu0 0.0
    %147 = vmatprep.subr.mxu0 0.0
    %148 = vmatpush1.msra.mxu0 0.0
    %149 = vmatprep.subr.mxu0 0.0
    %150 = vmatpush1.msra.mxu0 0.0
    %151 = vmatprep.subr.mxu0 0.0
    %152 = vmatpush1.msra.mxu0 0.0
    %153 = vmatprep.subr.mxu0 0.0
    %154 = vmatpush1.msra.mxu0 0.0
    %155 = vmatprep.subr.mxu0 0.0
    %156 = vmatpush1.msra.mxu0 0.0
    %157 = vmatprep.subr.mxu0 0.0
    %158 = vmatpush1.msra.mxu0 0.0
    %159 = vmatprep.subr.mxu0 0.0
    %160 = vmatpush1.msra.mxu0 0.0
    %161 = vmatprep.subr.mxu0 0.0
    %162 = vmatpush1.msra.mxu0 0.0
    %163 = vmatprep.subr.mxu0 0.0
    %164 = vmatpush1.msra.mxu0 0.0
    %165 = vmatprep.subr.mxu0 0.0
    %166 = vmatpush1.msra.mxu0 0.0
    %167 = vmatprep.subr.mxu0 0.0
    %168 = vmatpush1.msra.mxu0 0.0
    %169 = vmatprep.subr.mxu0 0.0
    %170 = vmatpush1.msra.mxu0 0.0
    %171 = vmatprep.subr.mxu0 0.0
    %172 = vmatpush1.msra.mxu0 0.0
    %173 = vmatprep.subr.mxu0 0.0
    %174 = vmatpush1.msra.mxu0 0.0
    %175 = vmatprep.subr.mxu0 0.0
    %176 = vmatpush1.msra.mxu0 0.0
    %177 = vmatprep.subr.mxu0 0.0
    %178 = vmatpush1.msra.mxu0 0.0
    %179 = vmatprep.subr.mxu0 0.0
    %180 = vmatpush1.msra.mxu0 0.0
    %181 = vmatprep.subr.mxu0 0.0
    %182 = vmatpush1.msra.mxu0 0.0
    %183 = vmatprep.subr.mxu0 0.0
    %184 = vmatpush1.msra.mxu0 0.0
    %185 = vmatprep.subr.mxu0 0.0
    %186 = vmatpush1.msra.mxu0 0.0
    %187 = vmatprep.subr.mxu0 0.0
    %188 = vmatpush1.msra.mxu0 0.0
    %189 = vmatprep.subr.mxu0 0.0
    %190 = vmatpush1.msra.mxu0 0.0
    %191 = vmatprep.subr.mxu0 0.0
    %192 = vmatpush1.msra.mxu0 0.0
    %193 = vmatprep.mubr.f32.mxu0 0.0
    %194 = vmatmul.mubr.f32.gmra.mrb[0].mxu0 %v106
    %v195 = vpop.f32.mrb[0].mxu0
    %v196 = vadd.f32 0.0, %v195
    %v197 = vpop.f32.mrb[0].mxu0
    %198 = vmatprep.mubr.f32.mxu0 0.0
    %199 = vmatmul.mubr.f32.gmra.mrb[0].mxu0 %v109
    %v200 = vpop.f32.mrb[0].mxu0
    %v201 = vadd.f32 0.0, %v200
    %v202 = vpop.f32.mrb[0].mxu0
    %203 = vmatprep.mubr.f32.mxu0 0.0
    %204 = vmatmul.mubr.f32.gmra.mrb[0].mxu0 %v112
    %v205 = vpop.f32.mrb[0].mxu0
    %v206 = vadd.f32 0.0, %v205
    %v207 = vpop.f32.mrb[0].mxu0
    %208 = vmatprep.mubr.f32.mxu0 0.0
    %209 = vmatmul.mubr.f32.gmra.mrb[0].mxu0 %v115
    %v210 = vpop.f32.mrb[0].mxu0
    %v211 = vadd.f32 0.0, %v210
    %v212 = vpop.f32.mrb[0].mxu0
    %213 = vmatprep.mubr.f32.mxu0 0.0
    %214 = vmatmul.mubr.f32.gmra.mrb[0].mxu0 %v118
    %v215 = vpop.f32.mrb[0].mxu0
    %v216 = vadd.f32 0.0, %v215
    %v217 = vpop.f32.mrb[0].mxu0
    %218 = vmatprep.mubr.f32.mxu0 0.0
    %219 = vmatmul.mubr.f32.gmra.mrb[0].mxu0 %v121
    %v220 = vpop.f32.mrb[0].mxu0
    %v221 = vadd.f32 0.0, %v220
    %v222 = vpop.f32.mrb[0].mxu0
    %223 = vmatprep.mubr.f32.mxu0 0.0
    %224 = vmatmul.mubr.f32.gmra.mrb[0].mxu0 %v124
    %v225 = vpop.f32.mrb[0].mxu0
    %v226 = vadd.f32 0.0, %v225
    %v227 = vpop.f32.mrb[0].mxu0
    %228 = vmatprep.mubr.f32.mxu0 0.0
    %229 = vmatmul.mubr.f32.gmra.mrb[0].mxu0 %v127
    %v230 = vpop.f32.mrb[0].mxu0
    %v231 = vadd.f32 0.0, %v230
    %v232 = vpop.f32.mrb[0].mxu0
    %233 = vdwg.mxu0
    %234 = vset.pattern.permute.xlu0 0
    %235 = vperm.xlu0 %234, %v34
    %v236 = vpop.permute.xlu0 %235
    %237 = vset.pattern.permute.xlu0 0
    %238 = vperm.xlu0 %237, %v36
    %v239 = vpop.permute.xlu0 %238
    %240 = vset.pattern.permute.xlu0 0
    %241 = vperm.xlu0 %240, %v38
    %v242 = vpop.permute.xlu0 %241
    %243 = vset.pattern.permute.xlu0 0
    %244 = vperm.xlu0 %243, %v40
    %v245 = vpop.permute.xlu0 %244
    %246 = vset.pattern.permute.xlu0 0
    %247 = vperm.xlu0 %246, %v42
    %v248 = vpop.permute.xlu0 %247
    %249 = vset.pattern.permute.xlu0 0
    %250 = vperm.xlu0 %249, %v44
    %v251 = vpop.permute.xlu0 %250
    %252 = vset.pattern.permute.xlu0 0
    %253 = vperm.xlu0 %252, %v46
    %v254 = vpop.permute.xlu0 %253
    %255 = vset.pattern.permute.xlu0 0
    %256 = vperm.xlu0 %255, %v48
    %v257 = vpop.permute.xlu0 %256
    %vm258 = vcmp.eq.s32.totalorder %v236, %v53
    %vm259 = vcmp.eq.s32.totalorder %v239, %v53
    %vm260 = vcmp.eq.s32.totalorder %v242, %v53
    %vm261 = vcmp.eq.s32.totalorder %v245, %v53
    %vm262 = vcmp.eq.s32.totalorder %v248, %v53
    %vm263 = vcmp.eq.s32.totalorder %v251, %v53
    %vm264 = vcmp.eq.s32.totalorder %v254, %v53
    %vm265 = vcmp.eq.s32.totalorder %v257, %v53
    %v266 = vsel %vm258, 1, 0
    %v267 = vsel %vm259, 1, 0
    %v268 = vsel %vm260, 1, 0
    %v269 = vsel %vm261, 1, 0
    %v270 = vsel %vm262, 1, 0
    %v271 = vsel %vm263, 1, 0
    %v272 = vsel %vm264, 1, 0
    %v273 = vsel %vm265, 1, 0
    %v274 = vcvt.s32.f32 %v266
    %v275 = vcvt.s32.f32 %v267
    %v276 = vcvt.s32.f32 %v268
    %v277 = vcvt.s32.f32 %v269
    %v278 = vcvt.s32.f32 %v270
    %v279 = vcvt.s32.f32 %v271
    %v280 = vcvt.s32.f32 %v272
    %v281 = vcvt.s32.f32 %v273
    %v282 = vmul.f32 %v196, %v51
    %vm283 = vcmask 261120
    %v284 = vsel %vm283, %v282, 0.0
    %285 = vadd.xlane.f32.xlu0 %v284
    %v286 = vpop.xlane.xlu0 %285
    %vm287 = vcmp.gt.s32.totalorder %v50, 0
    %v288 = vsel %vm287, %v286, -1e+30
    %v289 = vmul.f32 %v201, %v51
    %v290 = vsel %vm283, %v289, 0.0
    %291 = vadd.xlane.f32.xlu0 %v290
    %v292 = vpop.xlane.xlu0 %291
    %vm293 = vcmp.gt.s32.totalorder %v50, 1
    %v294 = vsel %vm293, %v292, -1e+30
    %v295 = vmul.f32 %v206, %v51
    %v296 = vsel %vm283, %v295, 0.0
    %297 = vadd.xlane.f32.xlu0 %v296
    %v298 = vpop.xlane.xlu0 %297
    %vm299 = vcmp.gt.s32.totalorder %v50, 2
    %v300 = vsel %vm299, %v298, -1e+30
    %v301 = vmul.f32 %v211, %v51
    %v302 = vsel %vm283, %v301, 0.0
    %303 = vadd.xlane.f32.xlu0 %v302
    %v304 = vpop.xlane.xlu0 %303
    %vm305 = vcmp.gt.s32.totalorder %v50, 3
    %v306 = vsel %vm305, %v304, -1e+30
    %v307 = vmul.f32 %v216, %v51
    %v308 = vsel %vm283, %v307, 0.0
    %309 = vadd.xlane.f32.xlu0 %v308
    %v310 = vpop.xlane.xlu0 %309
    %vm311 = vcmp.gt.s32.totalorder %v50, 4
    %v312 = vsel %vm311, %v310, -1e+30
    %v313 = vmul.f32 %v221, %v51
    %v314 = vsel %vm283, %v313, 0.0
    %315 = vadd.xlane.f32.xlu0 %v314
    %v316 = vpop.xlane.xlu0 %315
    %vm317 = vcmp.gt.s32.totalorder %v50, 5
    %v318 = vsel %vm317, %v316, -1e+30
    %v319 = vmul.f32 %v226, %v51
    %v320 = vsel %vm283, %v319, 0.0
    %321 = vadd.xlane.f32.xlu0 %v320
    %v322 = vpop.xlane.xlu0 %321
    %vm323 = vcmp.gt.s32.totalorder %v50, 6
    %v324 = vsel %vm323, %v322, -1e+30
    %v325 = vmul.f32 %v231, %v51
    %v326 = vsel %vm283, %v325, 0.0
    %327 = vadd.xlane.f32.xlu0 %v326
    %v328 = vpop.xlane.xlu0 %327
    %vm329 = vcmp.gt.s32.totalorder %v50, 7
    %v330 = vsel %vm329, %v328, -1e+30
    %v331 = vmax.f32 %v288, %v294
    %v332 = vmax.f32 %v331, %v300
    %v333 = vmax.f32 %v332, %v306
    %v334 = vmax.f32 %v333, %v312
    %v335 = vmax.f32 %v334, %v318
    %v336 = vmax.f32 %v335, %v324
    %v337 = vmax.f32 %v336, %v330
    %v338 = vsub.f32 %v288, %v337
    %v339 = vmul.f32 %v338, 1.442695
    %v340 = vpow.pop %v339
    %v341 = vsel %vm287, %v340, 0.0
    %v342 = vadd.f32 %v341, 0.0
    %v343 = vsub.f32 %v294, %v337
    %v344 = vmul.f32 %v343, 1.442695
    %v345 = vpow.pop %v344
    %v346 = vsel %vm293, %v345, 0.0
    %v347 = vadd.f32 %v342, %v346
    %v348 = vsub.f32 %v300, %v337
    %v349 = vmul.f32 %v348, 1.442695
    %v350 = vpow.pop %v349
    %v351 = vsel %vm299, %v350, 0.0
    %v352 = vadd.f32 %v347, %v351
    %v353 = vsub.f32 %v306, %v337
    %v354 = vmul.f32 %v353, 1.442695
    %v355 = vpow.pop %v354
    %v356 = vsel %vm305, %v355, 0.0
    %v357 = vadd.f32 %v352, %v356
    %v358 = vsub.f32 %v312, %v337
    %v359 = vmul.f32 %v358, 1.442695
    %v360 = vpow.pop %v359
    %v361 = vsel %vm311, %v360, 0.0
    %v362 = vadd.f32 %v357, %v361
    %v363 = vsub.f32 %v318, %v337
    %v364 = vmul.f32 %v363, 1.442695
    %v365 = vpow.pop %v364
    %v366 = vsel %vm317, %v365, 0.0
    %v367 = vadd.f32 %v362, %v366
    %v368 = vsub.f32 %v324, %v337
    %v369 = vmul.f32 %v368, 1.442695
    %v370 = vpow.pop %v369
    %v371 = vsel %vm323, %v370, 0.0
    %v372 = vadd.f32 %v367, %v371
    %v373 = vsub.f32 %v330, %v337
    %v374 = vmul.f32 %v373, 1.442695
    %v375 = vpow.pop %v374
    %v376 = vsel %vm329, %v375, 0.0
    %v377 = vadd.f32 %v372, %v376
    %v378 = vmax.f32 %v377, 1e-30
    %v379 = vrcp.pop %v378
    %v380 = vmul.f32 %v341, %v379
    %382 = vset.pattern.permute.xlu0 0
    %383 = vperm.xlu0 %382, %v380
    %v384 = vpop.permute.xlu0 %383
    %v386 = vmul.f32 %v384, %v274
    %v387 = vadd.f32 %v386, 0.0
    %v388 = vmul.f32 %v346, %v379
    %390 = vset.pattern.permute.xlu0 0
    %391 = vperm.xlu0 %390, %v388
    %v392 = vpop.permute.xlu0 %391
    %v394 = vmul.f32 %v392, %v275
    %v395 = vadd.f32 %v387, %v394
    %v396 = vmul.f32 %v351, %v379
    %398 = vset.pattern.permute.xlu0 0
    %399 = vperm.xlu0 %398, %v396
    %v400 = vpop.permute.xlu0 %399
    %v402 = vmul.f32 %v400, %v276
    %v403 = vadd.f32 %v395, %v402
    %v404 = vmul.f32 %v356, %v379
    %406 = vset.pattern.permute.xlu0 0
    %407 = vperm.xlu0 %406, %v404
    %v408 = vpop.permute.xlu0 %407
    %v410 = vmul.f32 %v408, %v277
    %v411 = vadd.f32 %v403, %v410
    %v412 = vmul.f32 %v361, %v379
    %414 = vset.pattern.permute.xlu0 0
    %415 = vperm.xlu0 %414, %v412
    %v416 = vpop.permute.xlu0 %415
    %v418 = vmul.f32 %v416, %v278
    %v419 = vadd.f32 %v411, %v418
    %v420 = vmul.f32 %v366, %v379
    %422 = vset.pattern.permute.xlu0 0
    %423 = vperm.xlu0 %422, %v420
    %v424 = vpop.permute.xlu0 %423
    %v426 = vmul.f32 %v424, %v279
    %v427 = vadd.f32 %v419, %v426
    %v428 = vmul.f32 %v371, %v379
    %430 = vset.pattern.permute.xlu0 0
    %431 = vperm.xlu0 %430, %v428
    %v432 = vpop.permute.xlu0 %431
    %v434 = vmul.f32 %v432, %v280
    %v435 = vadd.f32 %v427, %v434
    %v436 = vmul.f32 %v376, %v379
    %438 = vset.pattern.permute.xlu0 0
    %439 = vperm.xlu0 %438, %v436
    %v440 = vpop.permute.xlu0 %439
    %v442 = vmul.f32 %v440, %v281
    %v443 = vadd.f32 %v435, %v442
    %v444 = vld [vmem:[%s3] sm:$0xff]
    %v445 = vld [vmem:[%s3 + $0x8] sm:$0xff]
    %v447 = vsel %vm104, %v443, 0
    %449 = vmatprep.subr.mxu0 0.0
    %450 = vmatpush1.msra.mxu0 %v444
    %451 = vmatprep.subr.mxu0 0.0
    %452 = vmatpush1.msra.mxu0 %v445
    %453 = vmatprep.subr.mxu0 0.0
    %454 = vmatpush1.msra.mxu0 0.0
    %455 = vmatprep.subr.mxu0 0.0
    %456 = vmatpush1.msra.mxu0 0.0
    %457 = vmatprep.subr.mxu0 0.0
    %458 = vmatpush1.msra.mxu0 0.0
    %459 = vmatprep.subr.mxu0 0.0
    %460 = vmatpush1.msra.mxu0 0.0
    %461 = vmatprep.subr.mxu0 0.0
    %462 = vmatpush1.msra.mxu0 0.0
    %463 = vmatprep.subr.mxu0 0.0
    %464 = vmatpush1.msra.mxu0 0.0
    %465 = vmatprep.subr.mxu0 0.0
    %466 = vmatpush1.msra.mxu0 0.0
    %467 = vmatprep.subr.mxu0 0.0
    %468 = vmatpush1.msra.mxu0 0.0
    %469 = vmatprep.subr.mxu0 0.0
    %470 = vmatpush1.msra.mxu0 0.0
    %471 = vmatprep.subr.mxu0 0.0
    %472 = vmatpush1.msra.mxu0 0.0
    %473 = vmatprep.subr.mxu0 0.0
    %474 = vmatpush1.msra.mxu0 0.0
    %475 = vmatprep.subr.mxu0 0.0
    %476 = vmatpush1.msra.mxu0 0.0
    %477 = vmatprep.subr.mxu0 0.0
    %478 = vmatpush1.msra.mxu0 0.0
    %479 = vmatprep.subr.mxu0 0.0
    %480 = vmatpush1.msra.mxu0 0.0
    %481 = vmatprep.subr.mxu0 0.0
    %482 = vmatpush1.msra.mxu0 0.0
    %483 = vmatprep.subr.mxu0 0.0
    %484 = vmatpush1.msra.mxu0 0.0
    %485 = vmatprep.subr.mxu0 0.0
    %486 = vmatpush1.msra.mxu0 0.0
    %487 = vmatprep.subr.mxu0 0.0
    %488 = vmatpush1.msra.mxu0 0.0
    %489 = vmatprep.subr.mxu0 0.0
    %490 = vmatpush1.msra.mxu0 0.0
    %491 = vmatprep.subr.mxu0 0.0
    %492 = vmatpush1.msra.mxu0 0.0
    %493 = vmatprep.subr.mxu0 0.0
    %494 = vmatpush1.msra.mxu0 0.0
    %495 = vmatprep.subr.mxu0 0.0
    %496 = vmatpush1.msra.mxu0 0.0
    %497 = vmatprep.subr.mxu0 0.0
    %498 = vmatpush1.msra.mxu0 0.0
    %499 = vmatprep.subr.mxu0 0.0
    %500 = vmatpush1.msra.mxu0 0.0
    %501 = vmatprep.subr.mxu0 0.0
    %502 = vmatpush1.msra.mxu0 0.0
    %503 = vmatprep.subr.mxu0 0.0
    %504 = vmatpush1.msra.mxu0 0.0
    %505 = vmatprep.subr.mxu0 0.0
    %506 = vmatpush1.msra.mxu0 0.0
    %507 = vmatprep.subr.mxu0 0.0
    %508 = vmatpush1.msra.mxu0 0.0
    %509 = vmatprep.subr.mxu0 0.0
    %510 = vmatpush1.msra.mxu0 0.0
    %511 = vmatprep.subr.mxu0 0.0
    %512 = vmatpush1.msra.mxu0 0.0
    %513 = vmatprep.mubr.f32.mxu0 0.0
    %514 = vmatmul.mubr.f32.gmra.mrb[0].mxu0 %v447
    %v515 = vpop.f32.mrb[0].mxu0
    %v516 = vadd.f32 0.0, %v515
    %v517 = vpop.f32.mrb[0].mxu0
    %518 = vdwg.mxu0
    %519 = vst.msk [vmem:[#allocation2] sm:$0xff] %vm283, %v516
    // Predicated region
    $region18: #{tpu_custom_call.1} parent=1 // pred_check
      _
    $region19: #{tpu_custom_call.1} parent=1 // pred_check_branch
      %521 = sbr.rel (0) target = $region21
    $region20: #{tpu_custom_call.1} parent=1 // pred_region
      %s523 = ssub.s32 128, 128
      %524 = vsyncadd [#allocation3], %s523
      %s526 = sshll.u32 [#allocation2], 4
      %s527 = int_to_ptr.vmem [resolvable:$true] %s526
      %529 = dma.vmem_to_hbm [thread:$0]  %s527, 128, %s4, [#allocation3]
    $region21: #{tpu_custom_call.1} parent=1 // pred_fallthru
      _
    // Predicated region
    $region22: #{tpu_custom_call.1} parent=1 // pred_check
      _
    $region23: #{tpu_custom_call.1} parent=1 // pred_check_branch
      %531 = sbr.rel (0) target = $region25
    $region24: #{tpu_custom_call.1} parent=1 // pred_region
      %532 = dma.done [#allocation3], 128
    $region25: #{tpu_custom_call.1} parent=1 // pred_fallthru
      _
    %533 = vsyncpa [#allocation3], 1

</llo_original>
